<compile_context>
chip_gen: v5e
topology: v5e:2x2
jax: 0.10.0
libtpu: 0.0.40
codegen_flags: <defaults>
</compile_context>

<pallas_src>
import jax
import jax.numpy as jnp
from jax.experimental import pallas as pl
from jax.experimental.pallas import tpu as pltpu


_LANE_COLS = 512                        # lane-dense slab width (multiple of 128)
_TARGET_TILE_BYTES = 4 * 1024 * 1024    # ~4 MiB per tile
_ROW_ALIGN = 32                         # sublane packing granularity (f32/bf16/int8)


def _round_up(n, m):
    return ((n + m - 1) // m) * m


def _ternarize_kernel(scalars_ref, x_ref, o_ref):
    # scalars_ref (SMEM, f32[2]) = [threshold, scale_factor]
    thr = scalars_ref[0]
    sf = scalars_ref[1]
    x = x_ref[...].astype(jnp.float32)
    # |x| <= thr -> 0, x > thr -> +sf, x < -thr -> -sf  (scale fused into selects)
    out = jnp.where(x > thr, sf, jnp.where(x < -thr, -sf, jnp.float32(0.0)))
    o_ref[...] = out.astype(o_ref.dtype)


def _ternarize_jnp(x, thr, sf):
    """Plain-jnp fallback for tiny inputs / ragged tails (< 512 elements)."""
    xf = x.astype(jnp.float32)
    out = jnp.where(xf > thr, sf, jnp.where(xf < -thr, -sf, jnp.float32(0.0)))
    return out.astype(x.dtype)


def ternarization(x, scale_factor, threshold):
    """Pallas implementation of Ternarization.forward: ternarize(x, t) * scale."""
    orig_shape = x.shape
    orig_dtype = x.dtype
    n = x.size

    # Runtime scalars (no recompile when threshold/scale change).
    thr = jnp.asarray(threshold, jnp.float32)
    sf = jnp.asarray(scale_factor, jnp.float32)

    flat = x.reshape(-1)
    n_main = (n // _LANE_COLS) * _LANE_COLS
    tail = n - n_main

    if n_main == 0:
        # Tiny input (< 512 elements): not worth a kernel launch.
        return _ternarize_jnp(flat, thr, sf).reshape(orig_shape)

    rows = n_main // _LANE_COLS
    dtype_bytes = jnp.dtype(orig_dtype).itemsize
    max_rows = max(_ROW_ALIGN, _TARGET_TILE_BYTES // (_LANE_COLS * dtype_bytes))

    if rows <= _ROW_ALIGN:
        # Full-extent block (allowed even when not a multiple of 8).
        row_block = rows
    else:
        # Minimize row padding: split into the fewest ~4 MiB blocks, but
        # guarantee >= 2 grid steps so v7x can shard across both TensorCores.
        n_blocks = pl.cdiv(rows, max_rows)
        if rows >= 64:
            n_blocks = max(n_blocks, 2)
        row_block = min(_round_up(pl.cdiv(rows, n_blocks), _ROW_ALIGN), rows)

    grid = (pl.cdiv(rows, row_block),)
    scalars = jnp.stack([thr, sf])

    main = flat.reshape(rows, _LANE_COLS) if tail == 0 else (
        flat[:n_main].reshape(rows, _LANE_COLS))

    out_main = pl.pallas_call(
        _ternarize_kernel,
        out_shape=jax.ShapeDtypeStruct((rows, _LANE_COLS), orig_dtype),
        grid_spec=pltpu.PrefetchScalarGridSpec(
            num_scalar_prefetch=1,
            grid=grid,
            in_specs=[pl.BlockSpec((row_block, _LANE_COLS), lambda i, s: (i, 0))],
            out_specs=pl.BlockSpec((row_block, _LANE_COLS), lambda i, s: (i, 0)),
        ),
        compiler_params=pltpu.CompilerParams(
            # Independent row-blocks: parallel lets v7x shard across its 2 TCs.
            dimension_semantics=("parallel",),
            # ~4 MiB tiles, double-buffered in+out ~= 16 MiB < 32 MiB on all gens.
            vmem_limit_bytes=32 * 1024 * 1024,
        ),
    )(scalars, main)

    if tail == 0:
        return out_main.reshape(orig_shape)

    # Ragged tail (< 512 elements): handle with plain jnp instead of padding
    # the whole tensor (avoids a full extra HBM round-trip).
    out_tail = _ternarize_jnp(flat[n_main:], thr, sf)
    return jnp.concatenate([out_main.reshape(-1), out_tail]).reshape(orig_shape)


def ternarization_ref(x, scale_factor, threshold):
    """Pure-JAX reference (mirrors the PyTorch forward)."""
    out = jnp.where(x > threshold, 1.0, jnp.where(x < -threshold, -1.0, 0.0))
    return (out * scale_factor).astype(x.dtype)


if __name__ == "__main__":
    scale_factor = 0.5
    threshold = 0.7

    # Shape consistent with a conv-activation input: NCHW = (2, 4, 16, 16)
    # (2048 elements -> hits the no-pad fast path: 4 rows x 512 lanes).
    key = jax.random.PRNGKey(0)
    x = jax.random.normal(key, (2, 4, 16, 16), dtype=jnp.float32)

    out = jax.block_until_ready(ternarization(x, scale_factor, threshold))
    ref = ternarization_ref(x, scale_factor, threshold)
    assert out.shape == x.shape and out.dtype == x.dtype
    assert jnp.allclose(out, ref), "Pallas output mismatch vs reference"

    # Ragged size: exercises kernel-on-aligned-prefix + jnp tail path.
    x2 = jax.random.normal(jax.random.PRNGKey(1), (2, 4, 16, 17), dtype=jnp.float32)
    out2 = jax.block_until_ready(ternarization(x2, scale_factor, threshold))
    ref2 = ternarization_ref(x2, scale_factor, threshold)
    assert out2.shape == x2.shape and out2.dtype == x2.dtype
    assert jnp.allclose(out2, ref2), "Pallas output mismatch vs reference (ragged)"

    print("KERNEL_OK")
</pallas_src>

<mosaic_0001>
module attributes {stable_mosaic.version = 11 : i64} {
  func.func @_ternarize_kernel(%arg0: i32, %arg1: memref<2xf32, #tpu.memory_space<smem>>, %arg2: memref<4x512xf32, #tpu.memory_space<vmem>>, %arg3: memref<4x512xf32, #tpu.memory_space<vmem>>) attributes {dimension_semantics = [#tpu.dimension_semantics<parallel>], iteration_bounds = array<i64: 1>, scalar_prefetch = 1 : i64, scratch_operands = 0 : i64, tpu.core_type = #tpu.core_type<tc>, window_params = [{transform_indices = @transform_0, window_bounds = array<i64: 4, 512>}, {transform_indices = @transform_1, window_bounds = array<i64: 4, 512>}]} {
    %c0 = arith.constant 0 : index
    %0 = memref.load %arg1[%c0] : memref<2xf32, #tpu.memory_space<smem>>
    %c1 = arith.constant 1 : index
    %1 = memref.load %arg1[%c1] : memref<2xf32, #tpu.memory_space<smem>>
    %c0_0 = arith.constant 0 : index
    %c0_1 = arith.constant 0 : index
    %2 = vector.load %arg2[%c0_0, %c0_1] : memref<4x512xf32, #tpu.memory_space<vmem>>, vector<4x512xf32>
    %3 = vector.broadcast %0 : f32 to vector<4x512xf32>
    %4 = arith.cmpf ogt, %2, %3 : vector<4x512xf32>
    %cst = arith.constant 0.000000e+00 : f32
    %5 = arith.subf %cst, %0 : f32
    %6 = vector.broadcast %5 : f32 to vector<4x512xf32>
    %7 = arith.cmpf olt, %2, %6 : vector<4x512xf32>
    %cst_2 = arith.constant 0.000000e+00 : f32
    %8 = arith.subf %cst_2, %1 : f32
    %cst_3 = arith.constant 0.000000e+00 : f32
    %9 = vector.broadcast %8 : f32 to vector<4x512xf32>
    %10 = vector.broadcast %cst_3 : f32 to vector<4x512xf32>
    %11 = arith.select %7, %9, %10 : vector<4x512xi1>, vector<4x512xf32>
    %12 = vector.broadcast %1 : f32 to vector<4x512xf32>
    %13 = arith.select %4, %12, %11 : vector<4x512xi1>, vector<4x512xf32>
    %c0_4 = arith.constant 0 : index
    %c0_5 = arith.constant 0 : index
    %14 = vector.load %arg3[%c0_4, %c0_5] : memref<4x512xf32, #tpu.memory_space<vmem>>, vector<4x512xf32>
    tpu.vector_store %arg3[%c0_4, %c0_5], %13 {strides = array<i32>} : memref<4x512xf32, #tpu.memory_space<vmem>>, vector<4x512xf32>,
    return
  }
  func.func @transform_0(%arg0: i32, %arg1: memref<2xf32, #tpu.memory_space<smem>>) -> (i32, i32) {
    %c0_i32 = arith.constant 0 : i32
    %c0_i32_0 = arith.constant 0 : i32
    return %arg0, %c0_i32 : i32, i32
  }
  func.func @transform_1(%arg0: i32, %arg1: memref<2xf32, #tpu.memory_space<smem>>) -> (i32, i32) {
    %c0_i32 = arith.constant 0 : i32
    %c0_i32_0 = arith.constant 0 : i32
    return %arg0, %c0_i32 : i32, i32
  }
}

</mosaic_0001>

<llo_original>
// kernel: tpu_custom_call.1
$region0: #{tpu_custom_call.1}
  #allocation0 [shape = 'u32[]', space=smem, size = 0x4, offset = 0x4, fixed_abs, tag = 'smem constant byte address 0x4 - core index']
  #allocation1 [shape = 'u32[72,128]{1,0:T(1,128)}', space=vmem, size = 0x9000, scoped, tag = 'internal scratch']
  #allocation2 [shape = 's32[1]{0}', space=sflag, size = 0x4, scoped, tag = 'scoped memory for tpu_custom_call.1']
  #allocation3 [shape = 'u8[512]{0}', space=smem, size = 0x200, scoped, tag = 'prefetched SMEM operand 0']
  %s0 = inlined_call_operand.hbm [shape: f32[2], index: 0, kind: input, shape index: {}]
  %s1 = inlined_call_operand.hbm [shape: f32[4,512], index: 1, kind: input, shape index: {}]
  %s2 = inlined_call_operand.hbm [shape: f32[4,512], index: 2, kind: output, shape index: {}]
  %s3 = sld [smem:[#allocation0]]
  $region18: #{tpu_custom_call.1} parent=0
    _
  %s5 = ssub.s32 1, %s3
  %s6 = scalar_select 0, %s5, %s3
  %s8 = sshll.u32 %s0, 4
  %s9 = int_to_ptr.hbm [resolvable:$true] %s8
  %11 = dma.hbm_to_smem %s9, 16, [#allocation3], [#allocation2]
  %13 = dma.done [#allocation2], 16
  %14 = sfence
  $region1: #{tpu_custom_call.1} parent=0
    #allocation4 [shape = 'u8[8192]{0}', space=vmem, size = 0x2000, scoped, tag = 'input window, operand 1, single buffered']
    #allocation5 [shape = 's32[1]{0}', space=sflag, size = 0x4, scoped, tag = 'scoped memory for tpu_custom_call.1']
    #allocation6 [shape = 's32[1]{0}', space=sflag, size = 0x4, scoped, tag = 'scoped memory for tpu_custom_call.1']
    #allocation7 [shape = 'u8[8192]{0}', space=vmem, size = 0x2000, scoped, tag = 'output window, operand 0, single buffered']
    %15 = vsyncpa [#allocation5], 0
    %16 = vsyncpa [#allocation6], 0
    // Predicated region
    $region2: #{tpu_custom_call.1} parent=1 // pred_check
      _
    $region3: #{tpu_custom_call.1} parent=1 // pred_check_branch
      %18 = sbr.rel (0) target = $region5
    $region4: #{tpu_custom_call.1} parent=1 // pred_region
      %20 = vsyncadd [#allocation5], 0
      %s22 = sshll.u32 %s1, 4
      %s23 = int_to_ptr.hbm [resolvable:$true] %s22
      %s24 = sshll.u32 [#allocation4], 4
      %s25 = int_to_ptr.vmem [resolvable:$true] %s24
      %27 = dma.hbm_to_vmem [thread:$0]  %s23, 256, %s25, [#allocation5]
    $region5: #{tpu_custom_call.1} parent=1 // pred_fallthru
      _
    // Predicated region
    $region6: #{tpu_custom_call.1} parent=1 // pred_check
      _
    $region7: #{tpu_custom_call.1} parent=1 // pred_check_branch
      %29 = sbr.rel (0) target = $region9
    $region8: #{tpu_custom_call.1} parent=1 // pred_region
      %31 = dma.done [#allocation5], 256
    $region9: #{tpu_custom_call.1} parent=1 // pred_fallthru
      _
    %s32 = sld [smem:[#allocation3]]
    %s33 = sld [smem:[#allocation3 + $0x1]]
    %v34 = vld [vmem:[#allocation4] sm:$0xff]
    %v35 = vld [vmem:[#allocation4 + $0x8] sm:$0xff]
    %v36 = vstv %s32
    %vm37 = vcmp.gt.f32.partialorder %v34, %v36
    %vm38 = vcmp.gt.f32.partialorder %v35, %v36
    %s39 = ssub.f32 0.0, %s32
    %v40 = vstv %s39
    %vm41 = vcmp.lt.f32.partialorder %v34, %v40
    %vm42 = vcmp.lt.f32.partialorder %v35, %v40
    %s43 = ssub.f32 0.0, %s33
    %v44 = vstv %s43
    %v45 = vsel %vm41, %v44, 0.0
    %v46 = vsel %vm42, %v44, 0.0
    %v47 = vstv %s33
    %v48 = vsel %vm37, %v47, %v45
    %v49 = vsel %vm38, %v47, %v46
    %50 = vst [vmem:[#allocation7] sm:$0xff] %v48
    %51 = vst [vmem:[#allocation7 + $0x8] sm:$0xff] %v49
    // Predicated region
    $region10: #{tpu_custom_call.1} parent=1 // pred_check
      _
    $region11: #{tpu_custom_call.1} parent=1 // pred_check_branch
      %53 = sbr.rel (0) target = $region13
    $region12: #{tpu_custom_call.1} parent=1 // pred_region
      %55 = vsyncadd [#allocation6], 0
      %s57 = sshll.u32 [#allocation7], 4
      %s58 = int_to_ptr.vmem [resolvable:$true] %s57
      %s59 = sshll.u32 %s2, 4
      %s60 = int_to_ptr.hbm [resolvable:$true] %s59
      %62 = dma.vmem_to_hbm [thread:$0]  %s58, 256, %s60, [#allocation6]
    $region13: #{tpu_custom_call.1} parent=1 // pred_fallthru
      _
    // Predicated region
    $region14: #{tpu_custom_call.1} parent=1 // pred_check
      _
    $region15: #{tpu_custom_call.1} parent=1 // pred_check_branch
      %64 = sbr.rel (0) target = $region17
    $region16: #{tpu_custom_call.1} parent=1 // pred_region
      %66 = dma.done [#allocation6], 256
    $region17: #{tpu_custom_call.1} parent=1 // pred_fallthru
      _
    %67 = vsyncpa [#allocation5], 1
    %68 = vsyncpa [#allocation6], 1

</llo_original>
